<compile_context>
chip_gen: v6e
topology: v6e:2x2x1
jax: 0.10.0
libtpu: 0.0.40
codegen_flags: <defaults>
</compile_context>

<pallas_src>
import jax
import jax.numpy as jnp
from jax import lax
from jax.experimental import pallas as pl
from jax.experimental.pallas import tpu as pltpu


def _round_up(x: int, m: int) -> int:
    return (x + m - 1) // m * m


def avg_kernel(text_ref, table_ref, out_ref):
    """One (batch-tile, vocab-tile) grid step.

    text_ref : (TB, L)      int32   token ids for this batch tile
    table_ref: (TV, D_pad)  float32 vocab tile of the embedding table
    out_ref  : (TB, D_pad)  float32 resident accumulator (same block for all v)
    """
    v_idx = pl.program_id(1)

    @pl.when(v_idx == 0)
    def _():
        out_ref[...] = jnp.zeros_like(out_ref)

    tok = text_ref[...]                              # (TB, L) int32
    TB, L = tok.shape
    TV = table_ref.shape[0]
    v_base = v_idx * TV

    # Histogram of this vocab tile: counts[b, v] = #{t : tok[b, t] == v_base + v}.
    # Accumulate as int32 (one compare + one add per token on the VPU);
    # convert to f32 once, just before the MXU matmul.
    vocab_iota = v_base + lax.broadcasted_iota(jnp.int32, (TB, TV), 1)
    counts = jnp.zeros((TB, TV), jnp.int32)
    for l in range(L):   # L is small & static; unrolled compares on the VPU
        counts = counts + (vocab_iota == tok[:, l][:, None]).astype(jnp.int32)

    # Sum of the embeddings whose tokens fall in this vocab tile:
    #   counts @ table_tile   (MXU, f32 accumulate into the resident output).
    out_ref[...] += jnp.dot(counts.astype(jnp.float32), table_ref[...],
                            preferred_element_type=jnp.float32)


def avg_forward(text, table, *, batch_tile=None, vocab_tile=2048):
    """text: (B, L) int32, table: (V, D) float32 -> (B, D) float32 (sum over L)."""
    B, L = text.shape
    V, D = table.shape

    # Lane-dense output / table: pad D up to a multiple of 128.
    D_pad = _round_up(D, 128)

    # Batch tile: at least 8 sublanes, at most 128 MXU rows per block.
    TB = min(128, _round_up(B, 8)) if batch_tile is None else _round_up(batch_tile, 8)
    B_pad = _round_up(B, TB)

    # Vocab tile: multiple of 128; a single tile when the vocab is small.
    vt_cap = max(128, _round_up(vocab_tile, 128))
    TV = _round_up(V, 128) if V <= vt_cap else vt_cap
    V_pad = _round_up(V, TV)

    text_p = jnp.pad(text, ((0, B_pad - B), (0, 0)))            # padded rows sliced off below
    table_p = jnp.pad(table, ((0, V_pad - V), (0, D_pad - D)))  # padded vocab rows are zero
    # TODO(synk): if bf16 numerics are acceptable, cast table_p to bf16 here to halve
    # HBM traffic and hit the v6e/v7x bf16 MXU path (keep the f32 accumulate).

    grid_b = B_pad // TB
    grid_v = V_pad // TV

    # Advisory cost for XLA's scheduler around the custom call.
    cost = pl.CostEstimate(
        flops=2 * B_pad * V_pad * D_pad + B_pad * V_pad * L,
        transcendentals=0,
        bytes_accessed=grid_b * V_pad * D_pad * 4 + B_pad * L * 4 + B_pad * D_pad * 4,
    )

    # Explicit VMEM budget: double-buffered table + text tiles, resident output,
    # plus headroom for the int32 counts / iota intermediates.  Capped at 64 MiB
    # so the limit is valid on v7x as well as v5e/v6e.
    tile_bytes = (2 * TV * D_pad * 4 + 2 * TB * L * 4
                  + 2 * TB * D_pad * 4 + 6 * TB * TV * 4)
    vmem_limit = int(min(max(2 * tile_bytes, 8 << 20), 64 << 20))

    out_p = pl.pallas_call(
        avg_kernel,
        out_shape=jax.ShapeDtypeStruct((B_pad, D_pad), jnp.float32),
        grid=(grid_b, grid_v),
        in_specs=[
            pl.BlockSpec((TB, L), lambda b, v: (b, 0)),       # token ids per batch tile
            pl.BlockSpec((TV, D_pad), lambda b, v: (v, 0)),   # embedding-table vocab tile
        ],
        out_specs=pl.BlockSpec((TB, D_pad), lambda b, v: (b, 0)),
        compiler_params=pltpu.CompilerParams(
            dimension_semantics=("parallel", "arbitrary"),
            vmem_limit_bytes=vmem_limit,
        ),
        cost_estimate=cost,
    )(text_p, table_p)

    return out_p[:B, :D]


if __name__ == "__main__":
    # Small shapes consistent with the module's forward; chosen so the padding
    # (B 12->16, D 64->128, V 200->256) and both grid axes (2 batch blocks x
    # 2 vocab tiles, exercising the resident accumulator) are covered.
    B, L, V, D = 12, 16, 200, 64

    key = jax.random.PRNGKey(0)
    k_tok, k_tbl = jax.random.split(key)

    text = jax.random.randint(k_tok, (B, L), 0, V, dtype=jnp.int32)
    table = jax.random.normal(k_tbl, (V, D), dtype=jnp.float32)

    out = avg_forward(text, table, batch_tile=8, vocab_tile=128)
    out = jax.block_until_ready(out)

    # Reference in plain JAX: embedding lookup then sum over dim=1
    # (the module sums despite its "AVG" name).
    ref = jnp.sum(table[text], axis=1)
    assert out.shape == (B, D)
    assert jnp.allclose(out, ref, atol=1e-4, rtol=1e-4)

    print("KERNEL_OK")
</pallas_src>

<mosaic_0001>
module attributes {stable_mosaic.version = 11 : i64} {
  func.func @avg_kernel(%arg0: i32, %arg1: i32, %arg2: memref<8x16xi32, #tpu.memory_space<vmem>>, %arg3: memref<128x128xf32, #tpu.memory_space<vmem>>, %arg4: memref<8x128xf32, #tpu.memory_space<vmem>>) attributes {dimension_semantics = [#tpu.dimension_semantics<parallel>, #tpu.dimension_semantics<arbitrary>], iteration_bounds = array<i64: 2, 2>, scalar_prefetch = 0 : i64, scratch_operands = 0 : i64, tpu.core_type = #tpu.core_type<tc>, window_params = [{transform_indices = @transform_0, window_bounds = array<i64: 8, 16>}, {transform_indices = @transform_1, window_bounds = array<i64: 128, 128>}, {transform_indices = @transform_2, window_bounds = array<i64: 8, 128>}]} {
    %c0_i32 = arith.constant 0 : i32
    %0 = arith.cmpi eq, %arg1, %c0_i32 : i32
    %1 = arith.extui %0 : i1 to i32
    %c0_i32_0 = arith.constant 0 : i32
    %2 = arith.cmpi ne, %1, %c0_i32_0 : i32
    scf.if %2 {
      %cst_9 = arith.constant 0.000000e+00 : f32
      %127 = vector.broadcast %cst_9 : f32 to vector<8x128xf32>
      %c0_10 = arith.constant 0 : index
      %c0_11 = arith.constant 0 : index
      %128 = vector.load %arg4[%c0_10, %c0_11] : memref<8x128xf32, #tpu.memory_space<vmem>>, vector<8x128xf32>
      tpu.vector_store %arg4[%c0_10, %c0_11], %127 {strides = array<i32>} : memref<8x128xf32, #tpu.memory_space<vmem>>, vector<8x128xf32>,
    } else {
    }
    %c0 = arith.constant 0 : index
    %c0_1 = arith.constant 0 : index
    %3 = vector.load %arg2[%c0, %c0_1] : memref<8x16xi32, #tpu.memory_space<vmem>>, vector<8x16xi32>
    %c128_i32 = arith.constant 128 : i32
    %4 = arith.muli %arg1, %c128_i32 : i32
    %5 = tpu.iota {dimensions = array<i32: 1>} : vector<8x128xi32>
    %6 = vector.broadcast %4 : i32 to vector<8x128xi32>
    %7 = arith.addi %6, %5 : vector<8x128xi32>
    %c0_i32_2 = arith.constant 0 : i32
    %8 = vector.broadcast %c0_i32_2 : i32 to vector<8x128xi32>
    %9 = vector.extract_strided_slice %3 {offsets = [0, 0], sizes = [8, 1], strides = [1, 1]} : vector<8x16xi32> to vector<8x1xi32>
    %10 = vector.shape_cast %9 : vector<8x1xi32> to vector<8xi32>
    %11 = vector.shape_cast %10 : vector<8xi32> to vector<8x1xi32>
    %12 = vector.broadcast %11 : vector<8x1xi32> to vector<8x128xi32>
    %13 = arith.cmpi eq, %7, %12 : vector<8x128xi32>
    %14 = arith.extui %13 : vector<8x128xi1> to vector<8x128xi32>
    %15 = arith.addi %8, %14 : vector<8x128xi32>
    %16 = vector.extract_strided_slice %3 {offsets = [0, 1], sizes = [8, 1], strides = [1, 1]} : vector<8x16xi32> to vector<8x1xi32>
    %17 = vector.shape_cast %16 : vector<8x1xi32> to vector<8xi32>
    %18 = vector.shape_cast %17 : vector<8xi32> to vector<8x1xi32>
    %19 = vector.broadcast %18 : vector<8x1xi32> to vector<8x128xi32>
    %20 = arith.cmpi eq, %7, %19 : vector<8x128xi32>
    %21 = arith.extui %20 : vector<8x128xi1> to vector<8x128xi32>
    %22 = arith.addi %15, %21 : vector<8x128xi32>
    %23 = vector.extract_strided_slice %3 {offsets = [0, 2], sizes = [8, 1], strides = [1, 1]} : vector<8x16xi32> to vector<8x1xi32>
    %24 = vector.shape_cast %23 : vector<8x1xi32> to vector<8xi32>
    %25 = vector.shape_cast %24 : vector<8xi32> to vector<8x1xi32>
    %26 = vector.broadcast %25 : vector<8x1xi32> to vector<8x128xi32>
    %27 = arith.cmpi eq, %7, %26 : vector<8x128xi32>
    %28 = arith.extui %27 : vector<8x128xi1> to vector<8x128xi32>
    %29 = arith.addi %22, %28 : vector<8x128xi32>
    %30 = vector.extract_strided_slice %3 {offsets = [0, 3], sizes = [8, 1], strides = [1, 1]} : vector<8x16xi32> to vector<8x1xi32>
    %31 = vector.shape_cast %30 : vector<8x1xi32> to vector<8xi32>
    %32 = vector.shape_cast %31 : vector<8xi32> to vector<8x1xi32>
    %33 = vector.broadcast %32 : vector<8x1xi32> to vector<8x128xi32>
    %34 = arith.cmpi eq, %7, %33 : vector<8x128xi32>
    %35 = arith.extui %34 : vector<8x128xi1> to vector<8x128xi32>
    %36 = arith.addi %29, %35 : vector<8x128xi32>
    %37 = vector.extract_strided_slice %3 {offsets = [0, 4], sizes = [8, 1], strides = [1, 1]} : vector<8x16xi32> to vector<8x1xi32>
    %38 = vector.shape_cast %37 : vector<8x1xi32> to vector<8xi32>
    %39 = vector.shape_cast %38 : vector<8xi32> to vector<8x1xi32>
    %40 = vector.broadcast %39 : vector<8x1xi32> to vector<8x128xi32>
    %41 = arith.cmpi eq, %7, %40 : vector<8x128xi32>
    %42 = arith.extui %41 : vector<8x128xi1> to vector<8x128xi32>
    %43 = arith.addi %36, %42 : vector<8x128xi32>
    %44 = vector.extract_strided_slice %3 {offsets = [0, 5], sizes = [8, 1], strides = [1, 1]} : vector<8x16xi32> to vector<8x1xi32>
    %45 = vector.shape_cast %44 : vector<8x1xi32> to vector<8xi32>
    %46 = vector.shape_cast %45 : vector<8xi32> to vector<8x1xi32>
    %47 = vector.broadcast %46 : vector<8x1xi32> to vector<8x128xi32>
    %48 = arith.cmpi eq, %7, %47 : vector<8x128xi32>
    %49 = arith.extui %48 : vector<8x128xi1> to vector<8x128xi32>
    %50 = arith.addi %43, %49 : vector<8x128xi32>
    %51 = vector.extract_strided_slice %3 {offsets = [0, 6], sizes = [8, 1], strides = [1, 1]} : vector<8x16xi32> to vector<8x1xi32>
    %52 = vector.shape_cast %51 : vector<8x1xi32> to vector<8xi32>
    %53 = vector.shape_cast %52 : vector<8xi32> to vector<8x1xi32>
    %54 = vector.broadcast %53 : vector<8x1xi32> to vector<8x128xi32>
    %55 = arith.cmpi eq, %7, %54 : vector<8x128xi32>
    %56 = arith.extui %55 : vector<8x128xi1> to vector<8x128xi32>
    %57 = arith.addi %50, %56 : vector<8x128xi32>
    %58 = vector.extract_strided_slice %3 {offsets = [0, 7], sizes = [8, 1], strides = [1, 1]} : vector<8x16xi32> to vector<8x1xi32>
    %59 = vector.shape_cast %58 : vector<8x1xi32> to vector<8xi32>
    %60 = vector.shape_cast %59 : vector<8xi32> to vector<8x1xi32>
    %61 = vector.broadcast %60 : vector<8x1xi32> to vector<8x128xi32>
    %62 = arith.cmpi eq, %7, %61 : vector<8x128xi32>
    %63 = arith.extui %62 : vector<8x128xi1> to vector<8x128xi32>
    %64 = arith.addi %57, %63 : vector<8x128xi32>
    %65 = vector.extract_strided_slice %3 {offsets = [0, 8], sizes = [8, 1], strides = [1, 1]} : vector<8x16xi32> to vector<8x1xi32>
    %66 = vector.shape_cast %65 : vector<8x1xi32> to vector<8xi32>
    %67 = vector.shape_cast %66 : vector<8xi32> to vector<8x1xi32>
    %68 = vector.broadcast %67 : vector<8x1xi32> to vector<8x128xi32>
    %69 = arith.cmpi eq, %7, %68 : vector<8x128xi32>
    %70 = arith.extui %69 : vector<8x128xi1> to vector<8x128xi32>
    %71 = arith.addi %64, %70 : vector<8x128xi32>
    %72 = vector.extract_strided_slice %3 {offsets = [0, 9], sizes = [8, 1], strides = [1, 1]} : vector<8x16xi32> to vector<8x1xi32>
    %73 = vector.shape_cast %72 : vector<8x1xi32> to vector<8xi32>
    %74 = vector.shape_cast %73 : vector<8xi32> to vector<8x1xi32>
    %75 = vector.broadcast %74 : vector<8x1xi32> to vector<8x128xi32>
    %76 = arith.cmpi eq, %7, %75 : vector<8x128xi32>
    %77 = arith.extui %76 : vector<8x128xi1> to vector<8x128xi32>
    %78 = arith.addi %71, %77 : vector<8x128xi32>
    %79 = vector.extract_strided_slice %3 {offsets = [0, 10], sizes = [8, 1], strides = [1, 1]} : vector<8x16xi32> to vector<8x1xi32>
    %80 = vector.shape_cast %79 : vector<8x1xi32> to vector<8xi32>
    %81 = vector.shape_cast %80 : vector<8xi32> to vector<8x1xi32>
    %82 = vector.broadcast %81 : vector<8x1xi32> to vector<8x128xi32>
    %83 = arith.cmpi eq, %7, %82 : vector<8x128xi32>
    %84 = arith.extui %83 : vector<8x128xi1> to vector<8x128xi32>
    %85 = arith.addi %78, %84 : vector<8x128xi32>
    %86 = vector.extract_strided_slice %3 {offsets = [0, 11], sizes = [8, 1], strides = [1, 1]} : vector<8x16xi32> to vector<8x1xi32>
    %87 = vector.shape_cast %86 : vector<8x1xi32> to vector<8xi32>
    %88 = vector.shape_cast %87 : vector<8xi32> to vector<8x1xi32>
    %89 = vector.broadcast %88 : vector<8x1xi32> to vector<8x128xi32>
    %90 = arith.cmpi eq, %7, %89 : vector<8x128xi32>
    %91 = arith.extui %90 : vector<8x128xi1> to vector<8x128xi32>
    %92 = arith.addi %85, %91 : vector<8x128xi32>
    %93 = vector.extract_strided_slice %3 {offsets = [0, 12], sizes = [8, 1], strides = [1, 1]} : vector<8x16xi32> to vector<8x1xi32>
    %94 = vector.shape_cast %93 : vector<8x1xi32> to vector<8xi32>
    %95 = vector.shape_cast %94 : vector<8xi32> to vector<8x1xi32>
    %96 = vector.broadcast %95 : vector<8x1xi32> to vector<8x128xi32>
    %97 = arith.cmpi eq, %7, %96 : vector<8x128xi32>
    %98 = arith.extui %97 : vector<8x128xi1> to vector<8x128xi32>
    %99 = arith.addi %92, %98 : vector<8x128xi32>
    %100 = vector.extract_strided_slice %3 {offsets = [0, 13], sizes = [8, 1], strides = [1, 1]} : vector<8x16xi32> to vector<8x1xi32>
    %101 = vector.shape_cast %100 : vector<8x1xi32> to vector<8xi32>
    %102 = vector.shape_cast %101 : vector<8xi32> to vector<8x1xi32>
    %103 = vector.broadcast %102 : vector<8x1xi32> to vector<8x128xi32>
    %104 = arith.cmpi eq, %7, %103 : vector<8x128xi32>
    %105 = arith.extui %104 : vector<8x128xi1> to vector<8x128xi32>
    %106 = arith.addi %99, %105 : vector<8x128xi32>
    %107 = vector.extract_strided_slice %3 {offsets = [0, 14], sizes = [8, 1], strides = [1, 1]} : vector<8x16xi32> to vector<8x1xi32>
    %108 = vector.shape_cast %107 : vector<8x1xi32> to vector<8xi32>
    %109 = vector.shape_cast %108 : vector<8xi32> to vector<8x1xi32>
    %110 = vector.broadcast %109 : vector<8x1xi32> to vector<8x128xi32>
    %111 = arith.cmpi eq, %7, %110 : vector<8x128xi32>
    %112 = arith.extui %111 : vector<8x128xi1> to vector<8x128xi32>
    %113 = arith.addi %106, %112 : vector<8x128xi32>
    %114 = vector.extract_strided_slice %3 {offsets = [0, 15], sizes = [8, 1], strides = [1, 1]} : vector<8x16xi32> to vector<8x1xi32>
    %115 = vector.shape_cast %114 : vector<8x1xi32> to vector<8xi32>
    %116 = vector.shape_cast %115 : vector<8xi32> to vector<8x1xi32>
    %117 = vector.broadcast %116 : vector<8x1xi32> to vector<8x128xi32>
    %118 = arith.cmpi eq, %7, %117 : vector<8x128xi32>
    %119 = arith.extui %118 : vector<8x128xi1> to vector<8x128xi32>
    %120 = arith.addi %113, %119 : vector<8x128xi32>
    %c0_3 = arith.constant 0 : index
    %c0_4 = arith.constant 0 : index
    %121 = vector.load %arg4[%c0_3, %c0_4] : memref<8x128xf32, #tpu.memory_space<vmem>>, vector<8x128xf32>
    %122 = arith.sitofp %120 : vector<8x128xi32> to vector<8x128xf32>
    %c0_5 = arith.constant 0 : index
    %c0_6 = arith.constant 0 : index
    %123 = vector.load %arg3[%c0_5, %c0_6] : memref<128x128xf32, #tpu.memory_space<vmem>>, vector<128x128xf32>
    %cst = arith.constant dense<0.000000e+00> : vector<8x128xf32>
    %124 = tpu.matmul %122, %123, %cst {dimension_numbers = #tpu.dot_dimension_numbers<[1], [0], [0], [1], [0, 0, 1, 1], [], []>} : vector<8x128xf32>, vector<128x128xf32>, vector<8x128xf32> -> vector<8x128xf32>
    %125 = arith.addf %121, %124 : vector<8x128xf32>
    %c0_7 = arith.constant 0 : index
    %c0_8 = arith.constant 0 : index
    %126 = vector.load %arg4[%c0_7, %c0_8] : memref<8x128xf32, #tpu.memory_space<vmem>>, vector<8x128xf32>
    tpu.vector_store %arg4[%c0_7, %c0_8], %125 {strides = array<i32>} : memref<8x128xf32, #tpu.memory_space<vmem>>, vector<8x128xf32>,
    return
  }
  func.func @transform_0(%arg0: i32, %arg1: i32) -> (i32, i32) {
    %c0_i32 = arith.constant 0 : i32
    %c0_i32_0 = arith.constant 0 : i32
    return %arg0, %c0_i32 : i32, i32
  }
  func.func @transform_1(%arg0: i32, %arg1: i32) -> (i32, i32) {
    %c0_i32 = arith.constant 0 : i32
    %c0_i32_0 = arith.constant 0 : i32
    return %arg1, %c0_i32 : i32, i32
  }
  func.func @transform_2(%arg0: i32, %arg1: i32) -> (i32, i32) {
    %c0_i32 = arith.constant 0 : i32
    %c0_i32_0 = arith.constant 0 : i32
    return %arg0, %c0_i32 : i32, i32
  }
}

</mosaic_0001>

<llo_original>
// kernel: tpu_custom_call.1
$region0: #{tpu_custom_call.1}
  #allocation0 [shape = 'u32[]', space=smem, size = 0x4, offset = 0x4, fixed_abs, tag = 'smem constant byte address 0x4 - core index']
  #allocation1 [shape = 'u32[144,128]{1,0:T(1,128)}', space=vmem, size = 0x12000, scoped, tag = 'internal scratch']
  %s0 = inlined_call_operand.hbm [shape: s32[16,16], index: 0, kind: input, shape index: {}]
  %s1 = inlined_call_operand.hbm [shape: f32[256,128], index: 1, kind: input, shape index: {}]
  %s2 = inlined_call_operand.hbm [shape: f32[16,128], index: 2, kind: output, shape index: {}]
  %s3 = sld [smem:[#allocation0]]
  $region53: #{tpu_custom_call.1} parent=0
    _
  %s5 = ssub.s32 1, %s3
  %s6 = scalar_select 0, %s5, %s3
  $region1: #{tpu_custom_call.1} parent=0
    #allocation2 [shape = 'u8[8192]{0}', space=vmem, size = 0x2000, scoped, tag = 'input window, operand 0']
    #allocation3 [shape = 's32[2]{0}', space=sflag, size = 0x8, scoped, tag = 'scoped memory for tpu_custom_call.1']
    #allocation4 [shape = 's32[2]{0}', space=sflag, size = 0x8, scoped, tag = 'scoped memory for tpu_custom_call.1']
    #allocation5 [shape = 'u8[131072]{0}', space=vmem, size = 0x20000, scoped, tag = 'input window, operand 1']
    #allocation6 [shape = 's32[2]{0}', space=sflag, size = 0x8, scoped, tag = 'scoped memory for tpu_custom_call.1']
    #allocation7 [shape = 'u8[8192]{0}', space=vmem, size = 0x2000, scoped, tag = 'output window, operand 0']
    %7 = vsyncpa [#allocation3], 0
    %s8 = scalar_lea.sflag [#allocation3], 1
    %9 = vsyncpa %s8, 0
    %10 = vsyncpa [#allocation6], 0
    %s11 = scalar_lea.sflag [#allocation6], 1
    %12 = vsyncpa %s11, 0
    %13 = vsyncpa [#allocation4], 0
    %s14 = scalar_lea.sflag [#allocation4], 1
    %15 = vsyncpa %s14, 0
    loop: start=0, step=1, limit=6
    $region2: #{tpu_custom_call.1} parent=1 // loop_pre_header
      _
    $region3: #{tpu_custom_call.1} parent=1 // loop_header
      %s17 = sphi 0, %s21
      %p18 = scmp.ge.s32.totalorder %s17, 6
      %s24 = sphi 0, %s36
      %s25 = sphi 0, %s32
      %s26 = sphi 0, %s24
      %s27 = sphi 0, %s25
      %s28 = sphi 0, %s26
      %s29 = sphi 0, %s27
      %s39 = sphi 0, %s41
      %s42 = sphi 0, %s39
      %s43 = sphi 0, %s42
      %s59 = sphi 0, %s43
      %s65 = sphi 0, %s67
      %s68 = sphi 0, %s65
      %s69 = sphi 0, %s68
      %s85 = sphi 0, %s69
      %s91 = sphi 0, %s93
      %s94 = sphi 0, %s91
      %s95 = sphi 0, %s94
      %s111 = sphi 0, %s95
    $region4: #{tpu_custom_call.1} parent=1 // loop_header_branch
      %20 = sbr.rel (%p18) target = $region8
    $region5: #{tpu_custom_call.1} parent=1 // loop_body
      %s22 = ssub.s32 %s17, 1
      %s23 = ssub.s32 %s17, 2
      %s30 = sadd.s32 1, %s25
      %p31 = scmp.ge.s32.totalorder %s30, 2
      %s32 = scalar_select %p31, 0, %s30
      %s33 = sadd.s32 1, %s24
      %s34 = scalar_select %p31, %s33, %s24
      %p35 = scmp.ge.s32.totalorder %s34, 2
      %s36 = scalar_select %p35, 0, %s34
      %s37 = ssub.s32 %s24, %s36
      %p38 = scmp.eq.s32.totalorder %s37, 0
      %s40 = sadd.s32 %s39, 1
      %s41 = scalar_select %p38, %s39, %s40
      %p44 = pneg %p38
      %p45 = scmp.eq.s32.totalorder %s17, 3
      %p46 = por %p44, %p45
      %p47 = scmp.ne.s32.totalorder %s39, %s42
      %p48 = scmp.eq.s32.totalorder %s17, 0
      %p49 = por %p47, %p48
      %p50 = scmp.ne.s32.totalorder %s39, %s42
      %p51 = scmp.eq.s32.totalorder %s22, 3
      %p52 = por %p50, %p51
      %p53 = scmp.ne.s32.totalorder %s42, %s43
      %p54 = scmp.eq.s32.totalorder %s22, 0
      %p55 = por %p53, %p54
      %p56 = scmp.ne.s32.totalorder %s42, %s43
      %p57 = scmp.eq.s32.totalorder %s23, 3
      %p58 = por %p56, %p57
      %p60 = scmp.ne.s32.totalorder %s43, %s59
      %p61 = scmp.eq.s32.totalorder %s23, 0
      %p62 = por %p60, %p61
      %s63 = ssub.s32 %s25, %s32
      %p64 = scmp.eq.s32.totalorder %s63, 0
      %s66 = sadd.s32 %s65, 1
      %s67 = scalar_select %p64, %s65, %s66
      %p70 = pneg %p64
      %p71 = scmp.eq.s32.totalorder %s17, 3
      %p72 = por %p70, %p71
      %p73 = scmp.ne.s32.totalorder %s65, %s68
      %p74 = scmp.eq.s32.totalorder %s17, 0
      %p75 = por %p73, %p74
      %p76 = scmp.ne.s32.totalorder %s65, %s68
      %p77 = scmp.eq.s32.totalorder %s22, 3
      %p78 = por %p76, %p77
      %p79 = scmp.ne.s32.totalorder %s68, %s69
      %p80 = scmp.eq.s32.totalorder %s22, 0
      %p81 = por %p79, %p80
      %p82 = scmp.ne.s32.totalorder %s68, %s69
      %p83 = scmp.eq.s32.totalorder %s23, 3
      %p84 = por %p82, %p83
      %p86 = scmp.ne.s32.totalorder %s69, %s85
      %p87 = scmp.eq.s32.totalorder %s23, 0
      %p88 = por %p86, %p87
      %s89 = ssub.s32 %s24, %s36
      %p90 = scmp.eq.s32.totalorder %s89, 0
      %s92 = sadd.s32 %s91, 1
      %s93 = scalar_select %p90, %s91, %s92
      %p96 = pneg %p90
      %p97 = scmp.eq.s32.totalorder %s17, 3
      %p98 = por %p96, %p97
      %p99 = scmp.ne.s32.totalorder %s91, %s94
      %p100 = scmp.eq.s32.totalorder %s17, 0
      %p101 = por %p99, %p100
      %p102 = scmp.ne.s32.totalorder %s91, %s94
      %p103 = scmp.eq.s32.totalorder %s22, 3
      %p104 = por %p102, %p103
      %p105 = scmp.ne.s32.totalorder %s94, %s95
      %p106 = scmp.eq.s32.totalorder %s22, 0
      %p107 = por %p105, %p106
      %p108 = scmp.ne.s32.totalorder %s94, %s95
      %p109 = scmp.eq.s32.totalorder %s23, 3
      %p110 = por %p108, %p109
      %p112 = scmp.ne.s32.totalorder %s95, %s111
      %p113 = scmp.eq.s32.totalorder %s23, 0
      %p114 = por %p112, %p113
      %p115 = scmp.le.s32.totalorder 1, %s17
      %p116 = scmp.lt.s32.totalorder %s17, 5
      %p117 = pnand %p115, %p116
      %p118 = pneg %p117
      // Predicated region
      $region9: #{tpu_custom_call.1} parent=5 // pred_check
        _
      $region10: #{tpu_custom_call.1} parent=5 // pred_check_branch
        %120 = sbr.rel (%p117) target = $region12
      $region11: #{tpu_custom_call.1} parent=5 // pred_region
        %s121 = ssub.s32 %s17, 1
      $region12: #{tpu_custom_call.1} parent=5 // pred_fallthru
        _
      %p122 = scmp.lt.s32.totalorder %s17, 4
      // Predicated region
      $region13: #{tpu_custom_call.1} parent=5 // pred_check
        %p123 = pneg %p122
      $region14: #{tpu_custom_call.1} parent=5 // pred_check_branch
        %125 = sbr.rel (%p123) target = $region16
      $region15: #{tpu_custom_call.1} parent=5 // pred_region
        // Predicated region
        $region17: #{tpu_custom_call.1} parent=15 // pred_check
          %p126 = pneg %p49
        $region18: #{tpu_custom_call.1} parent=15 // pred_check_branch
          %128 = sbr.rel (%p126) target = $region20
        $region19: #{tpu_custom_call.1} parent=15 // pred_region
          %s129 = sand.u32 %s39, 1
          %s130 = scalar_lea.sflag [#allocation3], %s129
          %s131 = sand.u32 %s39, 1
          %s132 = smul.addr %s131, 8
          %s133 = scalar_lea.vmem [#allocation2], %s132
          %s135 = ssub.s32 128, 128
          %136 = vsyncadd %s130, %s135
          %s137 = smul.addr %s24, 128
          %s138 = scalar_lea.hbm %s0, %s137
          %s140 = sshll.u32 %s133, 4
          %s141 = int_to_ptr.vmem [resolvable:$true] %s140
          %143 = dma.hbm_to_vmem [thread:$0]  %s138, 128, %s141, %s130
        $region20: #{tpu_custom_call.1} parent=15 // pred_fallthru
          _
        // Predicated region
        $region21: #{tpu_custom_call.1} parent=15 // pred_check
          %p144 = pneg %p75
        $region22: #{tpu_custom_call.1} parent=15 // pred_check_branch
          %146 = sbr.rel (%p144) target = $region24
        $region23: #{tpu_custom_call.1} parent=15 // pred_region
          %s147 = sand.u32 %s65, 1
          %s148 = scalar_lea.sflag [#allocation6], %s147
          %s149 = sand.u32 %s65, 1
          %s150 = smul.addr %s149, 128
          %s151 = scalar_lea.vmem [#allocation5], %s150
          %s152 = smul.u32 16, %s25
          %s154 = ssub.s32 2048, 2048
          %155 = vsyncadd %s148, %s154
          %s156 = smul.addr %s152, 128
          %s157 = scalar_lea.hbm %s1, %s156
          %s158 = sshll.u32 %s151, 4
          %s159 = int_to_ptr.vmem [resolvable:$true] %s158
          %164 = dma.hbm_to_vmem [thread:$0]  %s157, 2048, %s159, %s148, 128, 128, 8
        $region24: #{tpu_custom_call.1} parent=15 // pred_fallthru
          _
      $region16: #{tpu_custom_call.1} parent=5 // pred_fallthru
        _
      %p165 = scmp.le.s32.totalorder 1, %s17
      %p166 = scmp.lt.s32.totalorder %s17, 5
      %p167 = pnand %p165, %p166
      %p168 = pneg %p167
      // Predicated region
      $region25: #{tpu_custom_call.1} parent=5 // pred_check
        _
      $region26: #{tpu_custom_call.1} parent=5 // pred_check_branch
        %170 = sbr.rel (%p167) target = $region28
      $region27: #{tpu_custom_call.1} parent=5 // pred_region
        %s171 = ssub.s32 %s17, 1
        %s172 = sand.u32 %s42, 1
        %s173 = scalar_lea.sflag [#allocation3], %s172
        %s174 = sand.u32 %s42, 1
        %s175 = smul.addr %s174, 8
        %s176 = scalar_lea.vmem [#allocation2], %s175
        // Predicated region
        $region29: #{tpu_custom_call.1} parent=27 // pred_check
          %p177 = pneg %p55
        $region30: #{tpu_custom_call.1} parent=27 // pred_check_branch
          %179 = sbr.rel (%p177) target = $region32
        $region31: #{tpu_custom_call.1} parent=27 // pred_region
          %180 = dma.done %s173, 128
        $region32: #{tpu_custom_call.1} parent=27 // pred_fallthru
          _
        %s181 = sand.u32 %s68, 1
        %s182 = scalar_lea.sflag [#allocation6], %s181
        %s183 = sand.u32 %s68, 1
        %s184 = smul.addr %s183, 128
        %s185 = scalar_lea.vmem [#allocation5], %s184
        // Predicated region
        $region33: #{tpu_custom_call.1} parent=27 // pred_check
          %p186 = pneg %p81
        $region34: #{tpu_custom_call.1} parent=27 // pred_check_branch
          %188 = sbr.rel (%p186) target = $region36
        $region35: #{tpu_custom_call.1} parent=27 // pred_region
          %189 = dma.done %s182, 2048
        $region36: #{tpu_custom_call.1} parent=27 // pred_fallthru
          _
        %s190 = sand.u32 %s42, 1
        %s191 = scalar_lea.sflag [#allocation3], %s190
        %s192 = sand.u32 %s42, 1
        %s193 = smul.addr %s192, 8
        %s194 = scalar_lea.vmem [#allocation2], %s193
        %p195 = pneg %p55
        %p196 = pneg %p52
        %s197 = sand.u32 %s68, 1
        %s198 = scalar_lea.sflag [#allocation6], %s197
        %s199 = sand.u32 %s68, 1
        %s200 = smul.addr %s199, 128
        %s201 = scalar_lea.vmem [#allocation5], %s200
        %p202 = pneg %p81
        %p203 = pneg %p78
        %p204 = pneg %p107
        %p205 = pneg %p104
        %s206 = sand.u32 %s94, 1
        %s207 = scalar_lea.sflag [#allocation4], %s206
        %s208 = sand.u32 %s94, 1
        %s209 = smul.addr %s208, 8
        %s210 = scalar_lea.vmem [#allocation7], %s209
        %s211 = smul.u32 16, %s27
        %p212 = scmp.eq.s32.totalorder %s27, 0
        // Predicated region
        $region37: #{tpu_custom_call.1} parent=27 // pred_check
          %p213 = pneg %p212
        $region38: #{tpu_custom_call.1} parent=27 // pred_check_branch
          %215 = sbr.rel (%p213) target = $region40
        $region39: #{tpu_custom_call.1} parent=27 // pred_region
          %216 = vst [vmem:[%s210] sm:$0xff] 0.0
        $region40: #{tpu_custom_call.1} parent=27 // pred_fallthru
          _
        %v217 = vld [vmem:[%s176] sm:$0xff]
        %s218 = smul.u32 %s27, 128
        %v219 = vlaneseq
        %v220 = vand.u32 %v219, 127
        %v221 = vstv %s218
        %v222 = vadd.s32 %v221, %v220
        %223 = vset.pattern.permute.xlu0 0
        %224 = vperm.xlu0 %223, %v217
        %v225 = vpop.permute.xlu0 %224
        %vm226 = vcmp.eq.s32.totalorder %v222, %v225
        %v227 = vsel %vm226, 1, 0
        %228 = vset.pattern.permute.xlu0 1
        %229 = vperm.xlu0 %228, %v217
        %v230 = vpop.permute.xlu0 %229
        %vm231 = vcmp.eq.s32.totalorder %v222, %v230
        %v232 = vsel %vm231, 1, 0
        %v233 = vadd.s32 %v227, %v232
        %234 = vset.pattern.permute.xlu0 2
        %235 = vperm.xlu0 %234, %v217
        %v236 = vpop.permute.xlu0 %235
        %vm237 = vcmp.eq.s32.totalorder %v222, %v236
        %v238 = vsel %vm237, 1, 0
        %v239 = vadd.s32 %v233, %v238
        %240 = vset.pattern.permute.xlu0 3
        %241 = vperm.xlu0 %240, %v217
        %v242 = vpop.permute.xlu0 %241
        %vm243 = vcmp.eq.s32.totalorder %v222, %v242
        %v244 = vsel %vm243, 1, 0
        %v245 = vadd.s32 %v239, %v244
        %246 = vset.pattern.permute.xlu0 4
        %247 = vperm.xlu0 %246, %v217
        %v248 = vpop.permute.xlu0 %247
        %vm249 = vcmp.eq.s32.totalorder %v222, %v248
        %v250 = vsel %vm249, 1, 0
        %v251 = vadd.s32 %v245, %v250
        %252 = vset.pattern.permute.xlu0 5
        %253 = vperm.xlu0 %252, %v217
        %v254 = vpop.permute.xlu0 %253
        %vm255 = vcmp.eq.s32.totalorder %v222, %v254
        %v256 = vsel %vm255, 1, 0
        %v257 = vadd.s32 %v251, %v256
        %258 = vset.pattern.permute.xlu0 6
        %259 = vperm.xlu0 %258, %v217
        %v260 = vpop.permute.xlu0 %259
        %vm261 = vcmp.eq.s32.totalorder %v222, %v260
        %v262 = vsel %vm261, 1, 0
        %v263 = vadd.s32 %v257, %v262
        %264 = vset.pattern.permute.xlu0 7
        %265 = vperm.xlu0 %264, %v217
        %v266 = vpop.permute.xlu0 %265
        %vm267 = vcmp.eq.s32.totalorder %v222, %v266
        %v268 = vsel %vm267, 1, 0
        %v269 = vadd.s32 %v263, %v268
        %270 = vset.pattern.permute.xlu0 8
        %271 = vperm.xlu0 %270, %v217
        %v272 = vpop.permute.xlu0 %271
        %vm273 = vcmp.eq.s32.totalorder %v222, %v272
        %v274 = vsel %vm273, 1, 0
        %v275 = vadd.s32 %v269, %v274
        %276 = vset.pattern.permute.xlu0 9
        %277 = vperm.xlu0 %276, %v217
        %v278 = vpop.permute.xlu0 %277
        %vm279 = vcmp.eq.s32.totalorder %v222, %v278
        %v280 = vsel %vm279, 1, 0
        %v281 = vadd.s32 %v275, %v280
        %282 = vset.pattern.permute.xlu0 10
        %283 = vperm.xlu0 %282, %v217
        %v284 = vpop.permute.xlu0 %283
        %vm285 = vcmp.eq.s32.totalorder %v222, %v284
        %v286 = vsel %vm285, 1, 0
        %v287 = vadd.s32 %v281, %v286
        %288 = vset.pattern.permute.xlu0 11
        %289 = vperm.xlu0 %288, %v217
        %v290 = vpop.permute.xlu0 %289
        %vm291 = vcmp.eq.s32.totalorder %v222, %v290
        %v292 = vsel %vm291, 1, 0
        %v293 = vadd.s32 %v287, %v292
        %294 = vset.pattern.permute.xlu0 12
        %295 = vperm.xlu0 %294, %v217
        %v296 = vpop.permute.xlu0 %295
        %vm297 = vcmp.eq.s32.totalorder %v222, %v296
        %v298 = vsel %vm297, 1, 0
        %v299 = vadd.s32 %v293, %v298
        %300 = vset.pattern.permute.xlu0 13
        %301 = vperm.xlu0 %300, %v217
        %v302 = vpop.permute.xlu0 %301
        %vm303 = vcmp.eq.s32.totalorder %v222, %v302
        %v304 = vsel %vm303, 1, 0
        %v305 = vadd.s32 %v299, %v304
        %306 = vset.pattern.permute.xlu0 14
        %307 = vperm.xlu0 %306, %v217
        %v308 = vpop.permute.xlu0 %307
        %vm309 = vcmp.eq.s32.totalorder %v222, %v308
        %v310 = vsel %vm309, 1, 0
        %v311 = vadd.s32 %v305, %v310
        %312 = vset.pattern.permute.xlu0 15
        %313 = vperm.xlu0 %312, %v217
        %v314 = vpop.permute.xlu0 %313
        %vm315 = vcmp.eq.s32.totalorder %v222, %v314
        %v316 = vsel %vm315, 1, 0
        %v317 = vadd.s32 %v311, %v316
        %v318 = vld [vmem:[%s210] sm:$0xff]
        %v319 = vcvt.s32.f32 %v317
        %v320 = vld [vmem:[%s185] sm:$0xff]
        %v321 = vld [vmem:[%s185 + $0x8] sm:$0xff]
        %v322 = vld [vmem:[%s185 + $0x10] sm:$0xff]
        %v323 = vld [vmem:[%s185 + $0x18] sm:$0xff]
        %v324 = vld [vmem:[%s185 + $0x20] sm:$0xff]
        %v325 = vld [vmem:[%s185 + $0x28] sm:$0xff]
        %v326 = vld [vmem:[%s185 + $0x30] sm:$0xff]
        %v327 = vld [vmem:[%s185 + $0x38] sm:$0xff]
        %v328 = vld [vmem:[%s185 + $0x40] sm:$0xff]
        %v329 = vld [vmem:[%s185 + $0x48] sm:$0xff]
        %v330 = vld [vmem:[%s185 + $0x50] sm:$0xff]
        %v331 = vld [vmem:[%s185 + $0x58] sm:$0xff]
        %v332 = vld [vmem:[%s185 + $0x60] sm:$0xff]
        %v333 = vld [vmem:[%s185 + $0x68] sm:$0xff]
        %v334 = vld [vmem:[%s185 + $0x70] sm:$0xff]
        %v335 = vld [vmem:[%s185 + $0x78] sm:$0xff]
        %336 = vmatprep.subr.mxu0 0.0
        %337 = vmatpush1.msra.mxu0 %v335
        %338 = vmatprep.subr.mxu0 0.0
        %339 = vmatpush1.msra.mxu0 %v334
        %340 = vmatprep.subr.mxu0 0.0
        %341 = vmatpush1.msra.mxu0 %v333
        %342 = vmatprep.subr.mxu0 0.0
        %343 = vmatpush1.msra.mxu0 %v332
        %344 = vmatprep.subr.mxu0 0.0
        %345 = vmatpush1.msra.mxu0 %v331
        %346 = vmatprep.subr.mxu0 0.0
        %347 = vmatpush1.msra.mxu0 %v330
        %348 = vmatprep.subr.mxu0 0.0
        %349 = vmatpush1.msra.mxu0 %v329
        %350 = vmatprep.subr.mxu0 0.0
        %351 = vmatpush1.msra.mxu0 %v328
        %352 = vmatprep.subr.mxu0 0.0
        %353 = vmatpush1.msra.mxu0 %v327
        %354 = vmatprep.subr.mxu0 0.0
        %355 = vmatpush1.msra.mxu0 %v326
        %356 = vmatprep.subr.mxu0 0.0
        %357 = vmatpush1.msra.mxu0 %v325
        %358 = vmatprep.subr.mxu0 0.0
        %359 = vmatpush1.msra.mxu0 %v324
        %360 = vmatprep.subr.mxu0 0.0
        %361 = vmatpush1.msra.mxu0 %v323
        %362 = vmatprep.subr.mxu0 0.0
        %363 = vmatpush1.msra.mxu0 %v322
        %364 = vmatprep.subr.mxu0 0.0
        %365 = vmatpush1.msra.mxu0 %v321
        %366 = vmatprep.subr.mxu0 0.0
        %367 = vmatpush1.msra.mxu0 %v320
        %368 = vmatprep.subr.mxu0 0.0
        %369 = vmatpush2.msra.mxu0 0.0
        %370 = vmatprep.subr.mxu0 0.0
        %371 = vmatpush2.msra.mxu0 0.0
        %372 = vmatprep.subr.mxu0 0.0
        %373 = vmatpush2.msra.mxu0 0.0
        %374 = vmatprep.subr.mxu0 0.0
        %375 = vmatpush2.msra.mxu0 0.0
        %376 = vmatprep.subr.mxu0 0.0
        %377 = vmatpush2.msra.mxu0 0.0
        %378 = vmatprep.subr.mxu0 0.0
        %379 = vmatpush2.msra.mxu0 0.0
        %380 = vmatprep.subr.mxu0 0.0
        %381 = vmatpush2.msra.mxu0 0.0
        %382 = vmatprep.subr.mxu0 0.0
        %383 = vmatpush2.msra.mxu0 0.0
        %384 = vmatprep.subr.mxu0 0.0
        %385 = vmatpush2.msra.mxu0 0.0
        %386 = vmatprep.subr.mxu0 0.0
        %387 = vmatpush2.msra.mxu0 0.0
        %388 = vmatprep.subr.mxu0 0.0
        %389 = vmatpush2.msra.mxu0 0.0
        %390 = vmatprep.subr.mxu0 0.0
        %391 = vmatpush2.msra.mxu0 0.0
        %392 = vmatprep.subr.mxu0 0.0
        %393 = vmatpush2.msra.mxu0 0.0
        %394 = vmatprep.subr.mxu0 0.0
        %395 = vmatpush2.msra.mxu0 0.0
        %396 = vmatprep.subr.mxu0 0.0
        %397 = vmatpush2.msra.mxu0 0.0
        %398 = vmatprep.subr.mxu0 0.0
        %399 = vmatpush2.msra.mxu0 0.0
        %400 = vmatprep.mubr.f32.mxu0 0.0
        %401 = vmatmul.mubr.f32.gmra.mxu0 %v319
        %v402 = vpop.f32.mrf.mxu0
        %v403 = vadd.f32 0.0, %v402
        %v404 = vpop.f32.mrf.mxu0
        %405 = vdwg.mxu0
        %v406 = vadd.f32 %v318, %v403
        %407 = vst [vmem:[%s210] sm:$0xff] %v406
        %s408 = sand.u32 %s94, 1
        %s409 = scalar_lea.sflag [#allocation4], %s408
        %s410 = sand.u32 %s94, 1
        %s411 = smul.addr %s410, 8
        %s412 = scalar_lea.vmem [#allocation7], %s411
        // Predicated region
        $region41: #{tpu_custom_call.1} parent=27 // pred_check
          %p413 = pneg %p104
        $region42: #{tpu_custom_call.1} parent=27 // pred_check_branch
          %415 = sbr.rel (%p413) target = $region44
        $region43: #{tpu_custom_call.1} parent=27 // pred_region
          %s417 = ssub.s32 128, 128
          %418 = vsyncadd %s409, %s417
          %s419 = smul.addr %s26, 128
          %s420 = scalar_lea.hbm %s2, %s419
          %s422 = sshll.u32 %s412, 4
          %s423 = int_to_ptr.vmem [resolvable:$true] %s422
          %425 = dma.vmem_to_hbm [thread:$0]  %s423, 128, %s420, %s409
        $region44: #{tpu_custom_call.1} parent=27 // pred_fallthru
          _
      $region28: #{tpu_custom_call.1} parent=5 // pred_fallthru
        _
      %p426 = scmp.le.s32.totalorder 2, %s17
      // Predicated region
      $region45: #{tpu_custom_call.1} parent=5 // pred_check
        %p427 = pneg %p426
      $region46: #{tpu_custom_call.1} parent=5 // pred_check_branch
        %429 = sbr.rel (%p427) target = $region48
      $region47: #{tpu_custom_call.1} parent=5 // pred_region
        %s430 = ssub.s32 %s17, 2
        // Predicated region
        $region49: #{tpu_custom_call.1} parent=47 // pred_check
          %p431 = pneg %p110
        $region50: #{tpu_custom_call.1} parent=47 // pred_check_branch
          %433 = sbr.rel (%p431) target = $region52
        $region51: #{tpu_custom_call.1} parent=47 // pred_region
          %s434 = sand.u32 %s95, 1
          %s435 = scalar_lea.sflag [#allocation4], %s434
          %s436 = sand.u32 %s95, 1
          %s437 = smul.addr %s436, 8
          %s438 = scalar_lea.vmem [#allocation7], %s437
          %439 = dma.done %s435, 128
        $region52: #{tpu_custom_call.1} parent=47 // pred_fallthru
          _
      $region48: #{tpu_custom_call.1} parent=5 // pred_fallthru
        _
    $region6: #{tpu_custom_call.1} parent=1 // loop_footer
      %s21 = sadd.s32 1, %s17
    $region7: #{tpu_custom_call.1} parent=1 // loop_footer_branch
      %16 = sbr.rel target = $region3
    $region8: #{tpu_custom_call.1} parent=1 // loop_exit
      _
    %440 = vsyncpa [#allocation3], 1
    %s441 = scalar_lea.sflag [#allocation3], 1
    %442 = vsyncpa %s441, 1
    %443 = vsyncpa [#allocation6], 1
    %s444 = scalar_lea.sflag [#allocation6], 1
    %445 = vsyncpa %s444, 1
    %446 = vsyncpa [#allocation4], 1
    %s447 = scalar_lea.sflag [#allocation4], 1
    %448 = vsyncpa %s447, 1

</llo_original>
